<compile_context>
chip_gen: v6e
topology: v6e:2x2x1
jax: 0.10.0
libtpu: 0.0.40
codegen_flags: <defaults>
</compile_context>

<pallas_src>
import functools

import jax
import jax.numpy as jnp
from jax.experimental import pallas as pl
from jax.experimental.pallas import tpu as pltpu


def _ce_pair_kernel(out1_ref, out2_ref, labels_ref, loss_ref, acc_ref, *,
                    total_rows, block_rows, steps_per_core, inv_batch):
    """Accumulates per-row NLL of both logit streams; writes per-core mean-scaled partial."""
    c = pl.program_id(0)   # core / parallel axis
    i = pl.program_id(1)   # row-tile axis (reduction, "arbitrary")

    @pl.when(i == 0)
    def _():
        acc_ref[...] = jnp.zeros_like(acc_ref)

    # Logical (unclamped) tile index -> validity mask for ragged / OOB tiles.
    tile_idx = c * steps_per_core + i
    row0 = tile_idx * block_rows
    row_ids = row0 + jax.lax.broadcasted_iota(jnp.int32, (block_rows, 1), 0)
    row_valid = row_ids < total_rows                                  # [TB, 1]

    labels = labels_ref[...]                                          # [TB, 1]
    num_classes = out1_ref.shape[1]
    cls_ids = jax.lax.broadcasted_iota(
        jnp.int32, (block_rows, num_classes), 1)                      # [TB, C]
    tgt_mask = cls_ids == labels

    def row_nll(x_ref):
        x = x_ref[...].astype(jnp.float32)                            # [TB, C]
        x = jnp.where(row_valid, x, 0.0)        # sanitize padded rows (no NaN/Inf)
        m = jnp.max(x, axis=-1, keepdims=True)
        lse = jnp.log(jnp.sum(jnp.exp(x - m), axis=-1, keepdims=True)) + m
        picked = jnp.sum(jnp.where(tgt_mask, x, 0.0), axis=-1, keepdims=True)
        return lse - picked                                           # [TB, 1]

    contrib = row_nll(out1_ref) + row_nll(out2_ref)
    acc_ref[...] += jnp.where(row_valid, contrib, 0.0)

    @pl.when(i == pl.num_programs(1) - 1)
    def _():
        loss_ref[0, 0] = jnp.sum(acc_ref[...]) * jnp.float32(inv_batch)


def contrastive_loss(output1, output2, labels, *, max_block_rows=2048):
    """Pallas equivalent of ContrastiveLoss.forward(output1, output2, labels)."""
    B, C = output1.shape
    itemsize = jnp.dtype(output1.dtype).itemsize

    # Row tile sized by bytes (~2 MiB per logits buffer), multiple of 8.
    target_buf_bytes = 2 * 1024 * 1024
    tb = target_buf_bytes // max(1, C * itemsize)
    tb = max(8, min(max_block_rows, (tb // 8) * 8))
    rows_cap = ((B + 7) // 8) * 8
    TB = min(tb, rows_cap)

    num_tiles = pl.cdiv(B, TB)
    NC = 2 if num_tiles >= 2 else 1           # leading parallel axis (v7x: 2 TCs)
    spc = pl.cdiv(num_tiles, NC)              # row tiles per core

    def tile_map(c, i):
        # Clamp so a core's trailing fully-OOB tile re-reads the last valid
        # tile; its rows are masked in-kernel via the *unclamped* row index.
        return (jnp.minimum(c * spc + i, num_tiles - 1), 0)

    labels2d = labels.astype(jnp.int32).reshape(B, 1)

    # Explicit VMEM budget: 2 logits streams x double buffer + labels + acc.
    est_bytes = 4 * TB * C * itemsize + 3 * TB * 512 + (1 << 20)
    vmem_limit = int(min(max(2 * est_bytes, 8 << 20), 40 << 20))

    partials = pl.pallas_call(
        functools.partial(
            _ce_pair_kernel,
            total_rows=B, block_rows=TB, steps_per_core=spc, inv_batch=1.0 / B),
        out_shape=jax.ShapeDtypeStruct((NC, 1), jnp.float32),
        grid_spec=pltpu.PrefetchScalarGridSpec(
            num_scalar_prefetch=0,
            grid=(NC, spc),
            in_specs=[
                pl.BlockSpec((TB, C), tile_map),
                pl.BlockSpec((TB, C), tile_map),
                pl.BlockSpec((TB, 1), tile_map),
            ],
            out_specs=pl.BlockSpec((1, 1), lambda c, i: (c, 0),
                                   memory_space=pltpu.SMEM),
            scratch_shapes=[pltpu.VMEM((TB, 1), jnp.float32)],
        ),
        compiler_params=pltpu.CompilerParams(
            dimension_semantics=("parallel", "arbitrary"),
            vmem_limit_bytes=vmem_limit),
    )(output1, output2, labels2d)

    return jnp.sum(partials)


def _reference_loss(output1, output2, labels):
    """Pure-JAX reference matching nn.CrossEntropyLoss (mean reduction)."""
    def ce(logits):
        logp = jax.nn.log_softmax(logits.astype(jnp.float32), axis=-1)
        return -jnp.mean(logp[jnp.arange(logits.shape[0]), labels])
    return ce(output1) + ce(output2)


if __name__ == "__main__":
    key = jax.random.PRNGKey(0)
    k1, k2, k3, k4, k5, k6 = jax.random.split(key, 6)

    # Test 1: small single-tile case.
    B, C = 8, 32
    output1 = jax.random.normal(k1, (B, C), dtype=jnp.float32)
    output2 = jax.random.normal(k2, (B, C), dtype=jnp.float32)
    labels = jax.random.randint(k3, (B,), 0, C, dtype=jnp.int32)

    loss = jax.block_until_ready(contrastive_loss(output1, output2, labels))
    ref = _reference_loss(output1, output2, labels)
    assert jnp.allclose(loss, ref, atol=1e-5, rtol=1e-5), (loss, ref)

    # Test 2: multi-tile case exercising the 2-core parallel axis + clamped
    # trailing tile (3 row tiles split over NC=2 cores).
    B2, C2 = 24, 48
    o1 = jax.random.normal(k4, (B2, C2), dtype=jnp.float32)
    o2 = jax.random.normal(k5, (B2, C2), dtype=jnp.float32)
    lbl2 = jax.random.randint(k6, (B2,), 0, C2, dtype=jnp.int32)

    loss2 = jax.block_until_ready(
        contrastive_loss(o1, o2, lbl2, max_block_rows=8))
    ref2 = _reference_loss(o1, o2, lbl2)
    assert jnp.allclose(loss2, ref2, atol=1e-5, rtol=1e-5), (loss2, ref2)

    print("KERNEL_OK")
</pallas_src>

<mosaic_0001>
module attributes {stable_mosaic.version = 11 : i64} {
  func.func @_ce_pair_kernel(%arg0: i32, %arg1: i32, %arg2: memref<8x32xf32, #tpu.memory_space<vmem>>, %arg3: memref<8x32xf32, #tpu.memory_space<vmem>>, %arg4: memref<8x1xi32, #tpu.memory_space<vmem>>, %arg5: memref<1x1xf32, #tpu.memory_space<smem>>, %arg6: memref<8x1xf32, #tpu.memory_space<vmem>>) attributes {dimension_semantics = [#tpu.dimension_semantics<parallel>, #tpu.dimension_semantics<arbitrary>], iteration_bounds = array<i64: 1, 1>, scalar_prefetch = 0 : i64, scratch_operands = 1 : i64, tpu.core_type = #tpu.core_type<tc>, window_params = [{transform_indices = @transform_0, window_bounds = array<i64: 8, 32>}, {transform_indices = @transform_1, window_bounds = array<i64: 8, 32>}, {transform_indices = @transform_2, window_bounds = array<i64: 8, 1>}, {transform_indices = @transform_3, window_bounds = array<i64: 1, 1>}]} {
    %c0_i32 = arith.constant 0 : i32
    %0 = arith.cmpi eq, %arg1, %c0_i32 : i32
    %1 = arith.extui %0 : i1 to i32
    %c0_i32_0 = arith.constant 0 : i32
    %2 = arith.cmpi ne, %1, %c0_i32_0 : i32
    scf.if %2 {
      %cst_23 = arith.constant 0.000000e+00 : f32
      %62 = vector.broadcast %cst_23 : f32 to vector<8x1xf32>
      %c0_24 = arith.constant 0 : index
      %c0_25 = arith.constant 0 : index
      %63 = vector.load %arg6[%c0_24, %c0_25] : memref<8x1xf32, #tpu.memory_space<vmem>>, vector<8x1xf32>
      tpu.vector_store %arg6[%c0_24, %c0_25], %62 {strides = array<i32>} : memref<8x1xf32, #tpu.memory_space<vmem>>, vector<8x1xf32>,
    } else {
    }
    %c1_i32 = arith.constant 1 : i32
    %3 = arith.muli %arg0, %c1_i32 : i32
    %4 = arith.addi %3, %arg1 : i32
    %c8_i32 = arith.constant 8 : i32
    %5 = arith.muli %4, %c8_i32 : i32
    %6 = tpu.iota {dimensions = array<i32: 0>} : vector<8x1xi32>
    %7 = vector.broadcast %5 : i32 to vector<8x1xi32>
    %8 = arith.addi %7, %6 : vector<8x1xi32>
    %c8_i32_1 = arith.constant 8 : i32
    %9 = vector.broadcast %c8_i32_1 : i32 to vector<8x1xi32>
    %10 = arith.cmpi slt, %8, %9 : vector<8x1xi32>
    %c0 = arith.constant 0 : index
    %c0_2 = arith.constant 0 : index
    %11 = vector.load %arg4[%c0, %c0_2] : memref<8x1xi32, #tpu.memory_space<vmem>>, vector<8x1xi32>
    %12 = tpu.iota {dimensions = array<i32: 1>} : vector<8x32xi32>
    %13 = vector.broadcast %11 : vector<8x1xi32> to vector<8x32xi32>
    %14 = arith.cmpi eq, %12, %13 : vector<8x32xi32>
    %c0_3 = arith.constant 0 : index
    %c0_4 = arith.constant 0 : index
    %15 = vector.load %arg2[%c0_3, %c0_4] : memref<8x32xf32, #tpu.memory_space<vmem>>, vector<8x32xf32>
    %cst = arith.constant 0.000000e+00 : f32
    %16 = vector.shape_cast %10 : vector<8x1xi1> to vector<8x1xi1>
    %17 = vector.broadcast %16 : vector<8x1xi1> to vector<8x32xi1>
    %18 = vector.broadcast %cst : f32 to vector<8x32xf32>
    %19 = arith.select %17, %15, %18 : vector<8x32xi1>, vector<8x32xf32>
    %cst_5 = arith.constant dense<0xFF800000> : vector<8xf32>
    %20 = vector.multi_reduction <maximumf>, %19, %cst_5 [1] : vector<8x32xf32> to vector<8xf32>
    %21 = vector.shape_cast %20 : vector<8xf32> to vector<8x1xf32>
    %22 = vector.broadcast %21 : vector<8x1xf32> to vector<8x32xf32>
    %23 = arith.subf %19, %22 : vector<8x32xf32>
    %24 = math.exp %23 : vector<8x32xf32>
    %cst_6 = arith.constant dense<0.000000e+00> : vector<8xf32>
    %25 = vector.multi_reduction <add>, %24, %cst_6 [1] : vector<8x32xf32> to vector<8xf32>
    %26 = vector.shape_cast %25 : vector<8xf32> to vector<8x1xf32>
    %27 = math.log %26 : vector<8x1xf32>
    %28 = arith.addf %27, %21 : vector<8x1xf32>
    %cst_7 = arith.constant 0.000000e+00 : f32
    %29 = vector.broadcast %cst_7 : f32 to vector<8x32xf32>
    %30 = arith.select %14, %19, %29 : vector<8x32xi1>, vector<8x32xf32>
    %cst_8 = arith.constant dense<0.000000e+00> : vector<8xf32>
    %31 = vector.multi_reduction <add>, %30, %cst_8 [1] : vector<8x32xf32> to vector<8xf32>
    %32 = vector.shape_cast %31 : vector<8xf32> to vector<8x1xf32>
    %33 = arith.subf %28, %32 : vector<8x1xf32>
    %c0_9 = arith.constant 0 : index
    %c0_10 = arith.constant 0 : index
    %34 = vector.load %arg3[%c0_9, %c0_10] : memref<8x32xf32, #tpu.memory_space<vmem>>, vector<8x32xf32>
    %cst_11 = arith.constant 0.000000e+00 : f32
    %35 = vector.shape_cast %10 : vector<8x1xi1> to vector<8x1xi1>
    %36 = vector.broadcast %35 : vector<8x1xi1> to vector<8x32xi1>
    %37 = vector.broadcast %cst_11 : f32 to vector<8x32xf32>
    %38 = arith.select %36, %34, %37 : vector<8x32xi1>, vector<8x32xf32>
    %cst_12 = arith.constant dense<0xFF800000> : vector<8xf32>
    %39 = vector.multi_reduction <maximumf>, %38, %cst_12 [1] : vector<8x32xf32> to vector<8xf32>
    %40 = vector.shape_cast %39 : vector<8xf32> to vector<8x1xf32>
    %41 = vector.broadcast %40 : vector<8x1xf32> to vector<8x32xf32>
    %42 = arith.subf %38, %41 : vector<8x32xf32>
    %43 = math.exp %42 : vector<8x32xf32>
    %cst_13 = arith.constant dense<0.000000e+00> : vector<8xf32>
    %44 = vector.multi_reduction <add>, %43, %cst_13 [1] : vector<8x32xf32> to vector<8xf32>
    %45 = vector.shape_cast %44 : vector<8xf32> to vector<8x1xf32>
    %46 = math.log %45 : vector<8x1xf32>
    %47 = arith.addf %46, %40 : vector<8x1xf32>
    %cst_14 = arith.constant 0.000000e+00 : f32
    %48 = vector.broadcast %cst_14 : f32 to vector<8x32xf32>
    %49 = arith.select %14, %38, %48 : vector<8x32xi1>, vector<8x32xf32>
    %cst_15 = arith.constant dense<0.000000e+00> : vector<8xf32>
    %50 = vector.multi_reduction <add>, %49, %cst_15 [1] : vector<8x32xf32> to vector<8xf32>
    %51 = vector.shape_cast %50 : vector<8xf32> to vector<8x1xf32>
    %52 = arith.subf %47, %51 : vector<8x1xf32>
    %53 = arith.addf %33, %52 : vector<8x1xf32>
    %c0_16 = arith.constant 0 : index
    %c0_17 = arith.constant 0 : index
    %54 = vector.load %arg6[%c0_16, %c0_17] : memref<8x1xf32, #tpu.memory_space<vmem>>, vector<8x1xf32>
    %cst_18 = arith.constant 0.000000e+00 : f32
    %55 = vector.broadcast %cst_18 : f32 to vector<8x1xf32>
    %56 = arith.select %10, %53, %55 : vector<8x1xi1>, vector<8x1xf32>
    %57 = arith.addf %54, %56 : vector<8x1xf32>
    %c0_19 = arith.constant 0 : index
    %c0_20 = arith.constant 0 : index
    %58 = vector.load %arg6[%c0_19, %c0_20] : memref<8x1xf32, #tpu.memory_space<vmem>>, vector<8x1xf32>
    tpu.vector_store %arg6[%c0_19, %c0_20], %57 {strides = array<i32>} : memref<8x1xf32, #tpu.memory_space<vmem>>, vector<8x1xf32>,
    %c0_i32_21 = arith.constant 0 : i32
    %59 = arith.cmpi eq, %arg1, %c0_i32_21 : i32
    %60 = arith.extui %59 : i1 to i32
    %c0_i32_22 = arith.constant 0 : i32
    %61 = arith.cmpi ne, %60, %c0_i32_22 : i32
    scf.if %61 {
      %c0_23 = arith.constant 0 : index
      %c0_24 = arith.constant 0 : index
      %62 = vector.load %arg6[%c0_23, %c0_24] : memref<8x1xf32, #tpu.memory_space<vmem>>, vector<8x1xf32>
      %63 = vector.shape_cast %62 : vector<8x1xf32> to vector<1x8x1xf32>
      %cst_25 = arith.constant dense<0.000000e+00> : vector<1xf32>
      %64 = vector.multi_reduction <add>, %63, %cst_25 [1, 2] : vector<1x8x1xf32> to vector<1xf32>
      %65 = vector.shape_cast %64 : vector<1xf32> to vector<1x1x1xf32>
      %66 = vector.extract %65[0, 0, 0] : f32 from vector<1x1x1xf32>
      %cst_26 = arith.constant 1.250000e-01 : f32
      %67 = arith.mulf %66, %cst_26 : f32
      %c0_27 = arith.constant 0 : index
      %c0_28 = arith.constant 0 : index
      %68 = memref.load %arg5[%c0_27, %c0_28] : memref<1x1xf32, #tpu.memory_space<smem>>
      memref.store %67, %arg5[%c0_27, %c0_28] : memref<1x1xf32, #tpu.memory_space<smem>>
    } else {
    }
    return
  }
  func.func @transform_0(%arg0: i32, %arg1: i32) -> (i32, i32) {
    %c1_i32 = arith.constant 1 : i32
    %0 = arith.muli %arg0, %c1_i32 : i32
    %1 = arith.addi %0, %arg1 : i32
    %c0_i32 = arith.constant 0 : i32
    %2 = arith.minsi %1, %c0_i32 : i32
    %c0_i32_0 = arith.constant 0 : i32
    %c0_i32_1 = arith.constant 0 : i32
    return %2, %c0_i32_0 : i32, i32
  }
  func.func @transform_1(%arg0: i32, %arg1: i32) -> (i32, i32) {
    %c1_i32 = arith.constant 1 : i32
    %0 = arith.muli %arg0, %c1_i32 : i32
    %1 = arith.addi %0, %arg1 : i32
    %c0_i32 = arith.constant 0 : i32
    %2 = arith.minsi %1, %c0_i32 : i32
    %c0_i32_0 = arith.constant 0 : i32
    %c0_i32_1 = arith.constant 0 : i32
    return %2, %c0_i32_0 : i32, i32
  }
  func.func @transform_2(%arg0: i32, %arg1: i32) -> (i32, i32) {
    %c1_i32 = arith.constant 1 : i32
    %0 = arith.muli %arg0, %c1_i32 : i32
    %1 = arith.addi %0, %arg1 : i32
    %c0_i32 = arith.constant 0 : i32
    %2 = arith.minsi %1, %c0_i32 : i32
    %c0_i32_0 = arith.constant 0 : i32
    %c0_i32_1 = arith.constant 0 : i32
    return %2, %c0_i32_0 : i32, i32
  }
  func.func @transform_3(%arg0: i32, %arg1: i32) -> (i32, i32) {
    %c0_i32 = arith.constant 0 : i32
    %c0_i32_0 = arith.constant 0 : i32
    return %arg0, %c0_i32 : i32, i32
  }
}

</mosaic_0001>

<llo_original>
// kernel: tpu_custom_call.1
$region0: #{tpu_custom_call.1}
  #allocation0 [shape = 'u32[]', space=smem, size = 0x4, offset = 0x4, fixed_abs, tag = 'smem constant byte address 0x4 - core index']
  #allocation1 [shape = 'u32[144,128]{1,0:T(1,128)}', space=vmem, size = 0x12000, scoped, tag = 'internal scratch']
  #allocation2 [shape = 'f32[8,1]{1,0:T(8,128)}', space=vmem, size = 0x1000, scoped, tag = 'scratch operand']
  %s0 = inlined_call_operand.vmem [shape: f32[8,32], index: 0, kind: input, shape index: {}]
  %s1 = inlined_call_operand.hbm [shape: f32[8,32], index: 1, kind: input, shape index: {}]
  %s2 = inlined_call_operand.vmem [shape: s32[8,1], index: 2, kind: input, shape index: {}]
  %s3 = inlined_call_operand.hbm [shape: f32[1,1], index: 3, kind: output, shape index: {}]
  %s4 = sld [smem:[#allocation0]]
  $region34: #{tpu_custom_call.1} parent=0
    _
  %s6 = ssub.s32 1, %s4
  %s7 = scalar_select 0, %s6, %s4
  $region1: #{tpu_custom_call.1} parent=0
    #allocation3 [shape = 'u8[4096]{0}', space=vmem, size = 0x1000, scoped, tag = 'input window, operand 1, single buffered']
    #allocation4 [shape = 's32[1]{0}', space=sflag, size = 0x4, scoped, tag = 'scoped memory for tpu_custom_call.1']
    #allocation5 [shape = 's32[1]{0}', space=sflag, size = 0x4, scoped, tag = 'scoped memory for tpu_custom_call.1']
    #allocation6 [shape = 'u8[512]{0}', space=smem, size = 0x200, scoped, tag = 'output window, operand 0, single buffered']
    %8 = vsyncpa [#allocation4], 0
    %9 = vsyncpa [#allocation5], 0
    // Predicated region
    $region2: #{tpu_custom_call.1} parent=1 // pred_check
      _
    $region3: #{tpu_custom_call.1} parent=1 // pred_check_branch
      %11 = sbr.rel (0) target = $region5
    $region4: #{tpu_custom_call.1} parent=1 // pred_region
      %s12 = sadd.s32 0, 0
      %p13 = scmp.lt.s32.totalorder %s12, 0
      %s14 = scalar_select %p13, %s12, 0
      %p15 = scmp.lt.s32.totalorder %s14, 0
      %s16 = scalar_select %p15, %s14, 0
      %s17 = smul.addr %s16, 8
      %s18 = scalar_lea.vmem %s0, %s17
      %s19 = sadd.s32 0, 0
      %p20 = scmp.lt.s32.totalorder %s19, 0
      %s21 = scalar_select %p20, %s19, 0
    $region5: #{tpu_custom_call.1} parent=1 // pred_fallthru
      _
    // Predicated region
    $region6: #{tpu_custom_call.1} parent=1 // pred_check
      _
    $region7: #{tpu_custom_call.1} parent=1 // pred_check_branch
      %23 = sbr.rel (0) target = $region9
    $region8: #{tpu_custom_call.1} parent=1 // pred_region
      %s24 = sadd.s32 0, 0
      %p25 = scmp.lt.s32.totalorder %s24, 0
      %s26 = scalar_select %p25, %s24, 0
      %s28 = ssub.s32 128, 128
      %29 = vsyncadd [#allocation4], %s28
      %s30 = smul.addr %s26, 128
      %s31 = scalar_lea.hbm %s1, %s30
      %s33 = sshll.u32 [#allocation3], 4
      %s34 = int_to_ptr.vmem [resolvable:$true] %s33
      %36 = dma.hbm_to_vmem [thread:$0]  %s31, 128, %s34, [#allocation4]
    $region9: #{tpu_custom_call.1} parent=1 // pred_fallthru
      _
    // Predicated region
    $region10: #{tpu_custom_call.1} parent=1 // pred_check
      _
    $region11: #{tpu_custom_call.1} parent=1 // pred_check_branch
      %38 = sbr.rel (0) target = $region13
    $region12: #{tpu_custom_call.1} parent=1 // pred_region
      %s39 = sadd.s32 0, 0
      %p40 = scmp.lt.s32.totalorder %s39, 0
      %s41 = scalar_select %p40, %s39, 0
      %p42 = scmp.lt.s32.totalorder %s41, 0
      %s43 = scalar_select %p42, %s41, 0
      %s44 = smul.addr %s43, 8
      %s45 = scalar_lea.vmem %s2, %s44
      %s46 = sadd.s32 0, 0
      %p47 = scmp.lt.s32.totalorder %s46, 0
      %s48 = scalar_select %p47, %s46, 0
    $region13: #{tpu_custom_call.1} parent=1 // pred_fallthru
      _
    // Predicated region
    $region14: #{tpu_custom_call.1} parent=1 // pred_check
      _
    $region15: #{tpu_custom_call.1} parent=1 // pred_check_branch
      %50 = sbr.rel (0) target = $region17
    $region16: #{tpu_custom_call.1} parent=1 // pred_region
      %51 = dma.done [#allocation4], 128
    $region17: #{tpu_custom_call.1} parent=1 // pred_fallthru
      _
    %s52 = sadd.s32 0, 0
    %p53 = scmp.lt.s32.totalorder %s52, 0
    %s54 = scalar_select %p53, %s52, 0
    %p55 = scmp.lt.s32.totalorder %s54, 0
    %s56 = scalar_select %p55, %s54, 0
    %s57 = smul.addr %s56, 8
    %s58 = scalar_lea.vmem %s0, %s57
    %s59 = sadd.s32 0, 0
    %p60 = scmp.lt.s32.totalorder %s59, 0
    %s61 = scalar_select %p60, %s59, 0
    %p62 = scmp.lt.s32.totalorder %s61, 0
    %s63 = scalar_select %p62, %s61, 0
    %s64 = smul.addr %s63, 8
    %s65 = scalar_lea.vmem %s2, %s64
    %s66 = sadd.s32 0, 0
    %p67 = scmp.lt.s32.totalorder %s66, 0
    %s68 = scalar_select %p67, %s66, 0
    %p69 = scmp.lt.s32.totalorder %s68, 0
    %s70 = scalar_select %p69, %s68, 0
    %s71 = smul.addr %s70, 8
    %s72 = scalar_lea.vmem %s0, %s71
    %s73 = sadd.s32 0, 0
    %p74 = scmp.lt.s32.totalorder %s73, 0
    %s75 = scalar_select %p74, %s73, 0
    %s76 = sadd.s32 0, 0
    %p77 = scmp.lt.s32.totalorder %s76, 0
    %s78 = scalar_select %p77, %s76, 0
    %s79 = sadd.s32 0, 0
    %p80 = scmp.lt.s32.totalorder %s79, 0
    %s81 = scalar_select %p80, %s79, 0
    %p82 = scmp.lt.s32.totalorder %s81, 0
    %s83 = scalar_select %p82, %s81, 0
    %s84 = smul.addr %s83, 8
    %s85 = scalar_lea.vmem %s2, %s84
    %s86 = sadd.s32 0, 0
    %p87 = scmp.lt.s32.totalorder %s86, 0
    %s88 = scalar_select %p87, %s86, 0
    %p89 = scmp.eq.s32.totalorder 0, 0
    // Predicated region
    $region18: #{tpu_custom_call.1} parent=1 // pred_check
      %p90 = pneg %p89
    $region19: #{tpu_custom_call.1} parent=1 // pred_check_branch
      %92 = sbr.rel (%p90) target = $region21
    $region20: #{tpu_custom_call.1} parent=1 // pred_region
      %vm93 = vcmask 7168
      %94 = vst.msk [vmem:[#allocation2] sm:$0xff] %vm93, 0.0
    $region21: #{tpu_custom_call.1} parent=1 // pred_fallthru
      _
    %s95 = sadd.s32 0, 0
    %s96 = smul.u32 %s95, 8
    %v97 = vlaneseq
    %v98 = vshrl.u32 %v97, 7
    %v99 = vstv %s96
    %v100 = vadd.s32 %v99, %v98
    %vm101 = vcmp.lt.s32.totalorder %v100, 8
    %v102 = vld [vmem:[%s85] sm:$0xff]
    %v103 = vlaneseq
    %v104 = vand.u32 %v103, 127
    %105 = vset.pattern.permute.xlu0 0
    %106 = vperm.xlu0 %105, %v102
    %v107 = vpop.permute.xlu0 %106
    %vm108 = vcmp.eq.s32.totalorder %v104, %v107
    %v109 = vld [vmem:[%s72] sm:$0xff]
    %v110 = vsel %vm101, 1, 0
    %vm111 = vcmp.eq.s32.totalorder %v110, 1
    %v112 = vsel %vm111, %v109, 0.0
    %vm113 = vcmask 261120
    %v114 = vsel %vm113, %v112, -inf
    %115 = vmax.xlane.f32.xlu0 %v114
    %v116 = vpop.xlane.xlu0 %115
    %v117 = vsub.f32 %v112, %v116
    %v118 = vmul.f32 %v117, 1.442695
    %v119 = vpow.pop %v118
    %v120 = vsel %vm113, %v119, 0.0
    %121 = vadd.xlane.f32.xlu0 %v120
    %v122 = vpop.xlane.xlu0 %121
    %v123 = vlog2.pop %v122
    %v124 = vmul.f32 %v123, 0.6931472
    %v125 = vadd.f32 %v124, %v116
    %v126 = vsel %vm108, %v112, 0.0
    %v127 = vsel %vm113, %v126, 0.0
    %128 = vadd.xlane.f32.xlu0 %v127
    %v129 = vpop.xlane.xlu0 %128
    %v130 = vsub.f32 %v125, %v129
    %v131 = vld [vmem:[#allocation3] sm:$0xff]
    %v132 = vsel %vm111, %v131, 0.0
    %v133 = vsel %vm113, %v132, -inf
    %134 = vmax.xlane.f32.xlu0 %v133
    %v135 = vpop.xlane.xlu0 %134
    %v136 = vsub.f32 %v132, %v135
    %v137 = vmul.f32 %v136, 1.442695
    %v138 = vpow.pop %v137
    %v139 = vsel %vm113, %v138, 0.0
    %140 = vadd.xlane.f32.xlu0 %v139
    %v141 = vpop.xlane.xlu0 %140
    %v142 = vlog2.pop %v141
    %v143 = vmul.f32 %v142, 0.6931472
    %v144 = vadd.f32 %v143, %v135
    %v145 = vsel %vm108, %v132, 0.0
    %v146 = vsel %vm113, %v145, 0.0
    %147 = vadd.xlane.f32.xlu0 %v146
    %v148 = vpop.xlane.xlu0 %147
    %v149 = vsub.f32 %v144, %v148
    %v150 = vadd.f32 %v130, %v149
    %v151 = vld [vmem:[#allocation2] sm:$0xff]
    %v152 = vsel %vm101, %v150, 0.0
    %v153 = vadd.f32 %v151, %v152
    %vm154 = vcmask 7168
    %155 = vst.msk [vmem:[#allocation2] sm:$0xff] %vm154, %v153
    // Predicated region
    $region22: #{tpu_custom_call.1} parent=1 // pred_check
      %p156 = pneg %p89
    $region23: #{tpu_custom_call.1} parent=1 // pred_check_branch
      %158 = sbr.rel (%p156) target = $region25
    $region24: #{tpu_custom_call.1} parent=1 // pred_region
      %v159 = vld [vmem:[#allocation2] sm:$0xff]
      %v160 = vsel %vm154, %v159, 0.0
      %161 = vadd.xlane.f32.xlu0 %v160
      %v162 = vpop.xlane.xlu0 %161
      %v163 = vrot.slane %v162, 4
      %v164 = vadd.f32 %v162, %v163
      %v165 = vrot.slane %v164, 2
      %v166 = vadd.f32 %v164, %v165
      %v167 = vrot.slane %v166, 1
      %v168 = vadd.f32 %v166, %v167
      %s169 = vtos %v168
      %s170 = smul.f32 %s169, 0.125
      %s171 = scalar_lea.smem [#allocation6], 0
      %172 = sst [smem:[%s171]] %s170
    $region25: #{tpu_custom_call.1} parent=1 // pred_fallthru
      _
    // Predicated region
    $region26: #{tpu_custom_call.1} parent=1 // pred_check
      _
    $region27: #{tpu_custom_call.1} parent=1 // pred_check_branch
      %174 = sbr.rel (0) target = $region29
    $region28: #{tpu_custom_call.1} parent=1 // pred_region
      %s176 = ssub.s32 16, 16
      %177 = vsyncadd [#allocation5], %s176
      %180 = dma.smem_to_hbm [#allocation6], 16, %s3, [#allocation5]
    $region29: #{tpu_custom_call.1} parent=1 // pred_fallthru
      _
    // Predicated region
    $region30: #{tpu_custom_call.1} parent=1 // pred_check
      _
    $region31: #{tpu_custom_call.1} parent=1 // pred_check_branch
      %182 = sbr.rel (0) target = $region33
    $region32: #{tpu_custom_call.1} parent=1 // pred_region
      %183 = dma.done [#allocation5], 16
    $region33: #{tpu_custom_call.1} parent=1 // pred_fallthru
      _
    %184 = sfence
    %185 = vsyncpa [#allocation4], 1
    %186 = vsyncpa [#allocation5], 1

</llo_original>
